<compile_context>
chip_gen: v6e
topology: v6e:2x2x1
jax: 0.10.0
libtpu: 0.0.40
codegen_flags: <defaults>
</compile_context>

<pallas_src>
import math

import jax
import jax.numpy as jnp
from jax.experimental import pallas as pl
from jax.experimental.pallas import tpu as pltpu

_LOG2 = math.log(2.0)
_LANE = 128


# --------------------------------------------------------------------------- #
# Kernel
# --------------------------------------------------------------------------- #
def _jse_tile_kernel(a_ref, p_ref, pos_ref, neg_ref):
    i = pl.program_id(0)          # row tile of the (padded) B x B matrix
    j = pl.program_id(1)          # column tile (reduction axis, sequential)

    # Per-row-tile accumulators live in the resident output blocks.
    @pl.when(j == 0)
    def _():
        pos_ref[...] = jnp.zeros_like(pos_ref)
        neg_ref[...] = jnp.zeros_like(neg_ref)

    # MXU matmul contracting embed_dim of BOTH operands (A @ P^T without
    # materializing a transpose); native input dtype, f32 accumulation.
    d = jax.lax.dot_general(
        a_ref[...], p_ref[...],
        dimension_numbers=(((1,), (1,)), ((), ())),
        preferred_element_type=jnp.float32,
    )                                                      # [tm, tn] f32
    tm, tn = d.shape
    log2 = jnp.float32(_LOG2)

    # One stable softplus(d) pass (one exp + one log1p per element, EUP).
    #   softplus(-d) == softplus(d) - d
    #   diag    (E_pos): log2 - softplus(-d)      = log2 - sp + d
    #   offdiag (E_neg): softplus(-d) + d - log2  = sp - log2
    sp = jnp.maximum(d, 0.0) + jnp.log1p(jnp.exp(-jnp.abs(d)))

    # E_neg: sum-then-correct over the WHOLE tile (scalar log2 correction
    # instead of a per-element subtraction); diagonal entries, if any, are
    # removed below.  Lane reduce then sublane reduce -> (1, 1).
    tile_sum = jnp.sum(jnp.sum(sp, axis=1, keepdims=True),
                       axis=0, keepdims=True)
    neg_ref[0] += tile_sum - jnp.float32(tm * tn * _LOG2)

    # Diagonal work only on tiles that actually intersect the diagonal — the
    # vast majority of tiles skip the iota/compare/select path entirely.
    row0 = i * tm
    col0 = j * tn
    intersects = jnp.logical_and(row0 < col0 + tn, col0 < row0 + tm)

    @pl.when(intersects)
    def _():
        row = jax.lax.broadcasted_iota(jnp.int32, (tm, tn), 0) + row0
        col = jax.lax.broadcasted_iota(jnp.int32, (tm, tn), 1) + col0
        is_diag = row == col
        pos_vals = jnp.where(is_diag, log2 - sp + d, 0.0)   # E_pos terms
        neg_fix = jnp.where(is_diag, sp - log2, 0.0)         # counted above
        pos_ref[0] += jnp.sum(jnp.sum(pos_vals, axis=1, keepdims=True),
                              axis=0, keepdims=True)
        neg_ref[0] -= jnp.sum(jnp.sum(neg_fix, axis=1, keepdims=True),
                              axis=0, keepdims=True)


# --------------------------------------------------------------------------- #
# Tiling / VMEM planning
# --------------------------------------------------------------------------- #
def _physical_vmem_bytes():
    try:
        info = pltpu.get_tpu_info()
        cap = getattr(info, "vmem_capacity_bytes", None)
        if cap:
            return int(cap)
    except Exception:
        pass
    # Fall back to the smallest per-core VMEM across supported generations
    # (v7x: 64 MiB) so the plan is safe everywhere.
    return 64 * 1024 * 1024


def _round_up(x, m):
    return ((x + m - 1) // m) * m


def _step_vmem_bytes(tm, tn, d, itemsize):
    # Double-buffered input blocks + f32/i32 tile temporaries (d, softplus,
    # exp temp, iota/mask on diagonal tiles).  Deliberately conservative.
    return 2 * (tm + tn) * d * itemsize + 6 * tm * tn * 4


def _plan_tiles(B, D, itemsize, budget):
    """Return (B_pad, tm, tn) for tiling the B_pad x B_pad similarity matrix."""
    # Small batches: a single tile (block == full array dim is always legal).
    if B <= 512 and _step_vmem_bytes(B, B, D, itemsize) <= budget:
        return B, B, B

    # Zero-pad the batch to a lane-aligned size.  Padded rows/cols contribute
    # exactly 0 to both expectations (softplus(0) == log2), so the loss is
    # unchanged while every block stays MXU / lane aligned.
    B_pad = _round_up(B, _LANE)
    cands = [t for t in (2048, 1024, 512, 256, 128) if B_pad % t == 0] or [B_pad]

    def fits(tm, tn):
        return _step_vmem_bytes(tm, tn, D, itemsize) <= budget

    # Row tile: as large as the VMEM budget allows (HBM traffic is
    # (1 + B_pad/tm) * B_pad * D), but keep >= 2 row tiles so the 'parallel'
    # grid axis can shard across v7x's two TensorCores.
    tm = next((t for t in cands if 2 * t <= B_pad and fits(t, cands[-1])),
              cands[-1])
    # Column tile: as large as still fits next to tm (fewer grid steps); if
    # tn == B_pad the positive matrix is fully VMEM resident and is streamed
    # from HBM exactly once (biggest win on v5e's low HBM bandwidth).
    tn_cands = ([B_pad] if B_pad not in cands else []) + cands
    tn = next((t for t in tn_cands if fits(tm, t)), cands[-1])
    return B_pad, tm, tn


# --------------------------------------------------------------------------- #
# Wrapper
# --------------------------------------------------------------------------- #
def jensen_shannon_loss(embed_anchor, embed_positive, *, matmul_dtype=None):
    """embed_anchor, embed_positive: [batch_size, embed_dim] -> scalar loss.

    matmul_dtype: optionally cast inputs (e.g. jnp.bfloat16) before the MXU
    (f32 accumulation is kept); off by default to preserve numerics.
    """
    B, D = embed_anchor.shape
    if embed_positive.shape != (B, D):
        raise ValueError("embed_anchor / embed_positive shape mismatch")
    # NOTE: B == 1 divides by B*(B-1) == 0, exactly like the PyTorch module.

    if matmul_dtype is not None:
        embed_anchor = embed_anchor.astype(matmul_dtype)
        embed_positive = embed_positive.astype(matmul_dtype)
    itemsize = jnp.dtype(embed_anchor.dtype).itemsize

    physical_vmem = _physical_vmem_bytes()
    vmem_limit = int(physical_vmem * 0.85)        # ~54 MiB v7x, ~108 MiB v5e/v6e
    tile_budget = int(physical_vmem * 0.60)       # headroom for compiler scratch

    B_pad, tm, tn = _plan_tiles(B, D, itemsize, tile_budget)
    if B_pad != B:
        pad = B_pad - B
        embed_anchor = jnp.pad(embed_anchor, ((0, pad), (0, 0)))
        embed_positive = jnp.pad(embed_positive, ((0, pad), (0, 0)))

    n_i = B_pad // tm
    n_j = B_pad // tn

    cost = pl.CostEstimate(
        flops=2 * B_pad * B_pad * D,
        transcendentals=2 * B_pad * B_pad,        # exp + log1p per element
        bytes_accessed=(1 + n_i) * B_pad * D * itemsize + 2 * n_i * 4,
    )

    pos_out, neg_out = pl.pallas_call(
        _jse_tile_kernel,
        out_shape=(
            jax.ShapeDtypeStruct((n_i, 1, 1), jnp.float32),
            jax.ShapeDtypeStruct((n_i, 1, 1), jnp.float32),
        ),
        grid=(n_i, n_j),
        in_specs=[
            pl.BlockSpec((tm, D), lambda i, j: (i, 0)),   # anchor row tile
            pl.BlockSpec((tn, D), lambda i, j: (j, 0)),   # positive col tile
        ],
        out_specs=(
            pl.BlockSpec((1, 1, 1), lambda i, j: (i, 0, 0)),
            pl.BlockSpec((1, 1, 1), lambda i, j: (i, 0, 0)),
        ),
        compiler_params=pltpu.CompilerParams(
            dimension_semantics=("parallel", "arbitrary"),
            vmem_limit_bytes=vmem_limit,
        ),
        cost_estimate=cost,
    )(embed_anchor, embed_positive)

    e_pos = jnp.sum(pos_out) / B
    e_neg = jnp.sum(neg_out) / (B * (B - 1))
    return e_neg - e_pos


# --------------------------------------------------------------------------- #
# Pure-JAX reference (mirrors the PyTorch module exactly)
# --------------------------------------------------------------------------- #
def _reference(embed_anchor, embed_positive):
    B = embed_anchor.shape[0]
    d_prime = embed_anchor.astype(jnp.float32) @ embed_positive.astype(jnp.float32).T
    pos_mask = jnp.eye(B, dtype=jnp.float32)
    neg_mask = 1.0 - pos_mask
    sp = lambda x: jnp.maximum(x, 0.0) + jnp.log1p(jnp.exp(-jnp.abs(x)))
    e_pos = jnp.sum(_LOG2 - sp(-(d_prime * pos_mask))) / B
    e_neg = jnp.sum(sp(-(d_prime * neg_mask)) + d_prime * neg_mask - _LOG2) / (B * (B - 1))
    return e_neg - e_pos


if __name__ == "__main__":
    key = jax.random.PRNGKey(0)
    k1, k2 = jax.random.split(key)
    B, D = 8, 32
    embed_anchor = jax.random.normal(k1, (B, D), dtype=jnp.float32)
    embed_positive = jax.random.normal(k2, (B, D), dtype=jnp.float32)

    loss = jensen_shannon_loss(embed_anchor, embed_positive)
    loss = jax.block_until_ready(loss)

    ref = _reference(embed_anchor, embed_positive)
    assert jnp.allclose(loss, ref, atol=1e-4, rtol=1e-4), (loss, ref)

    print("KERNEL_OK")
</pallas_src>

<mosaic_0001>
module attributes {stable_mosaic.version = 11 : i64} {
  func.func @_jse_tile_kernel(%arg0: i32, %arg1: i32, %arg2: memref<8x32xf32, #tpu.memory_space<vmem>>, %arg3: memref<8x32xf32, #tpu.memory_space<vmem>>, %arg4: memref<1x1x1xf32, #tpu.memory_space<vmem>>, %arg5: memref<1x1x1xf32, #tpu.memory_space<vmem>>) attributes {dimension_semantics = [#tpu.dimension_semantics<parallel>, #tpu.dimension_semantics<arbitrary>], iteration_bounds = array<i64: 1, 1>, scalar_prefetch = 0 : i64, scratch_operands = 0 : i64, tpu.core_type = #tpu.core_type<tc>, window_params = [{transform_indices = @transform_0, window_bounds = array<i64: 8, 32>}, {transform_indices = @transform_1, window_bounds = array<i64: 8, 32>}, {transform_indices = @transform_2, window_bounds = array<i64: 1, 1, 1>}, {transform_indices = @transform_3, window_bounds = array<i64: 1, 1, 1>}]} {
    %c0_i32 = arith.constant 0 : i32
    %0 = arith.cmpi eq, %arg1, %c0_i32 : i32
    %1 = arith.extui %0 : i1 to i32
    %c0_i32_0 = arith.constant 0 : i32
    %2 = arith.cmpi ne, %1, %c0_i32_0 : i32
    scf.if %2 {
      %cst_20 = arith.constant 0.000000e+00 : f32
      %35 = vector.broadcast %cst_20 : f32 to vector<1x1x1xf32>
      %c0_21 = arith.constant 0 : index
      %c0_22 = arith.constant 0 : index
      %c0_23 = arith.constant 0 : index
      %36 = vector.load %arg4[%c0_21, %c0_22, %c0_23] : memref<1x1x1xf32, #tpu.memory_space<vmem>>, vector<1x1x1xf32>
      tpu.vector_store %arg4[%c0_21, %c0_22, %c0_23], %35 {strides = array<i32>} : memref<1x1x1xf32, #tpu.memory_space<vmem>>, vector<1x1x1xf32>,
      %cst_24 = arith.constant 0.000000e+00 : f32
      %37 = vector.broadcast %cst_24 : f32 to vector<1x1x1xf32>
      %c0_25 = arith.constant 0 : index
      %c0_26 = arith.constant 0 : index
      %c0_27 = arith.constant 0 : index
      %38 = vector.load %arg5[%c0_25, %c0_26, %c0_27] : memref<1x1x1xf32, #tpu.memory_space<vmem>>, vector<1x1x1xf32>
      tpu.vector_store %arg5[%c0_25, %c0_26, %c0_27], %37 {strides = array<i32>} : memref<1x1x1xf32, #tpu.memory_space<vmem>>, vector<1x1x1xf32>,
    } else {
    }
    %c0 = arith.constant 0 : index
    %c0_1 = arith.constant 0 : index
    %3 = vector.load %arg2[%c0, %c0_1] : memref<8x32xf32, #tpu.memory_space<vmem>>, vector<8x32xf32>
    %c0_2 = arith.constant 0 : index
    %c0_3 = arith.constant 0 : index
    %4 = vector.load %arg3[%c0_2, %c0_3] : memref<8x32xf32, #tpu.memory_space<vmem>>, vector<8x32xf32>
    %cst = arith.constant dense<0.000000e+00> : vector<8x8xf32>
    %5 = tpu.matmul %3, %4, %cst {dimension_numbers = #tpu.dot_dimension_numbers<[1], [1], [0], [0], [0, 0, 1, 0], [], []>} : vector<8x32xf32>, vector<8x32xf32>, vector<8x8xf32> -> vector<8x8xf32>
    %cst_4 = arith.constant 0.000000e+00 : f32
    %6 = vector.broadcast %cst_4 : f32 to vector<8x8xf32>
    %7 = arith.maximumf %5, %6 : vector<8x8xf32>
    %8 = math.absf %5 : vector<8x8xf32>
    %cst_5 = arith.constant 0.000000e+00 : f32
    %9 = vector.broadcast %cst_5 : f32 to vector<8x8xf32>
    %10 = arith.subf %9, %8 : vector<8x8xf32>
    %11 = math.exp %10 : vector<8x8xf32>
    %12 = math.log1p %11 : vector<8x8xf32>
    %13 = arith.addf %7, %12 : vector<8x8xf32>
    %cst_6 = arith.constant dense<0.000000e+00> : vector<8xf32>
    %14 = vector.multi_reduction <add>, %13, %cst_6 [1] : vector<8x8xf32> to vector<8xf32>
    %15 = vector.shape_cast %14 : vector<8xf32> to vector<8x1xf32>
    %cst_7 = arith.constant dense<0.000000e+00> : vector<1xf32>
    %16 = vector.multi_reduction <add>, %15, %cst_7 [0] : vector<8x1xf32> to vector<1xf32>
    %17 = vector.shape_cast %16 : vector<1xf32> to vector<1x1xf32>
    %c0_8 = arith.constant 0 : index
    %c0_9 = arith.constant 0 : index
    %c0_10 = arith.constant 0 : index
    %18 = vector.load %arg5[%c0_8, %c0_9, %c0_10] : memref<1x1x1xf32, #tpu.memory_space<vmem>>, vector<1x1x1xf32>
    %19 = vector.shape_cast %18 : vector<1x1x1xf32> to vector<1x1xf32>
    %cst_11 = arith.constant 44.3614197 : f32
    %20 = vector.broadcast %cst_11 : f32 to vector<1x1xf32>
    %21 = arith.subf %17, %20 : vector<1x1xf32>
    %22 = arith.addf %19, %21 : vector<1x1xf32>
    %c0_12 = arith.constant 0 : index
    %c0_13 = arith.constant 0 : index
    %c0_14 = arith.constant 0 : index
    %23 = vector.load %arg5[%c0_12, %c0_13, %c0_14] : memref<1x1x1xf32, #tpu.memory_space<vmem>>, vector<1x1x1xf32>
    %24 = vector.shape_cast %23 : vector<1x1x1xf32> to vector<1x1xf32>
    %25 = vector.shape_cast %22 : vector<1x1xf32> to vector<1x1x1xf32>
    tpu.vector_store %arg5[%c0_12, %c0_13, %c0_14], %25 {strides = array<i32>} : memref<1x1x1xf32, #tpu.memory_space<vmem>>, vector<1x1x1xf32>,
    %c8_i32 = arith.constant 8 : i32
    %26 = arith.muli %arg0, %c8_i32 : i32
    %c8_i32_15 = arith.constant 8 : i32
    %27 = arith.muli %arg1, %c8_i32_15 : i32
    %c8_i32_16 = arith.constant 8 : i32
    %28 = arith.addi %27, %c8_i32_16 : i32
    %29 = arith.cmpi slt, %26, %28 : i32
    %c8_i32_17 = arith.constant 8 : i32
    %30 = arith.addi %26, %c8_i32_17 : i32
    %31 = arith.cmpi slt, %27, %30 : i32
    %32 = arith.andi %29, %31 : i1
    %33 = arith.extui %32 : i1 to i32
    %cst_18 = arith.constant 0.693147182 : f32
    %c0_i32_19 = arith.constant 0 : i32
    %34 = arith.cmpi ne, %33, %c0_i32_19 : i32
    scf.if %34 {
      %35 = tpu.iota {dimensions = array<i32: 0>} : vector<8x8xi32>
      %36 = vector.broadcast %26 : i32 to vector<8x8xi32>
      %37 = arith.addi %35, %36 : vector<8x8xi32>
      %38 = tpu.iota {dimensions = array<i32: 1>} : vector<8x8xi32>
      %39 = vector.broadcast %27 : i32 to vector<8x8xi32>
      %40 = arith.addi %38, %39 : vector<8x8xi32>
      %41 = arith.cmpi eq, %37, %40 : vector<8x8xi32>
      %42 = vector.broadcast %cst_18 : f32 to vector<8x8xf32>
      %43 = arith.subf %42, %13 : vector<8x8xf32>
      %44 = arith.addf %43, %5 : vector<8x8xf32>
      %cst_20 = arith.constant 0.000000e+00 : f32
      %45 = vector.broadcast %cst_20 : f32 to vector<8x8xf32>
      %46 = arith.select %41, %44, %45 : vector<8x8xi1>, vector<8x8xf32>
      %47 = vector.broadcast %cst_18 : f32 to vector<8x8xf32>
      %48 = arith.subf %13, %47 : vector<8x8xf32>
      %cst_21 = arith.constant 0.000000e+00 : f32
      %49 = vector.broadcast %cst_21 : f32 to vector<8x8xf32>
      %50 = arith.select %41, %48, %49 : vector<8x8xi1>, vector<8x8xf32>
      %c0_22 = arith.constant 0 : index
      %c0_23 = arith.constant 0 : index
      %c0_24 = arith.constant 0 : index
      %51 = vector.load %arg4[%c0_22, %c0_23, %c0_24] : memref<1x1x1xf32, #tpu.memory_space<vmem>>, vector<1x1x1xf32>
      %52 = vector.shape_cast %51 : vector<1x1x1xf32> to vector<1x1xf32>
      %cst_25 = arith.constant dense<0.000000e+00> : vector<8xf32>
      %53 = vector.multi_reduction <add>, %46, %cst_25 [1] : vector<8x8xf32> to vector<8xf32>
      %54 = vector.shape_cast %53 : vector<8xf32> to vector<8x1xf32>
      %cst_26 = arith.constant dense<0.000000e+00> : vector<1xf32>
      %55 = vector.multi_reduction <add>, %54, %cst_26 [0] : vector<8x1xf32> to vector<1xf32>
      %56 = vector.shape_cast %55 : vector<1xf32> to vector<1x1xf32>
      %57 = arith.addf %52, %56 : vector<1x1xf32>
      %c0_27 = arith.constant 0 : index
      %c0_28 = arith.constant 0 : index
      %c0_29 = arith.constant 0 : index
      %58 = vector.load %arg4[%c0_27, %c0_28, %c0_29] : memref<1x1x1xf32, #tpu.memory_space<vmem>>, vector<1x1x1xf32>
      %59 = vector.shape_cast %58 : vector<1x1x1xf32> to vector<1x1xf32>
      %60 = vector.shape_cast %57 : vector<1x1xf32> to vector<1x1x1xf32>
      tpu.vector_store %arg4[%c0_27, %c0_28, %c0_29], %60 {strides = array<i32>} : memref<1x1x1xf32, #tpu.memory_space<vmem>>, vector<1x1x1xf32>,
      %c0_30 = arith.constant 0 : index
      %c0_31 = arith.constant 0 : index
      %c0_32 = arith.constant 0 : index
      %61 = vector.load %arg5[%c0_30, %c0_31, %c0_32] : memref<1x1x1xf32, #tpu.memory_space<vmem>>, vector<1x1x1xf32>
      %62 = vector.shape_cast %61 : vector<1x1x1xf32> to vector<1x1xf32>
      %cst_33 = arith.constant dense<0.000000e+00> : vector<8xf32>
      %63 = vector.multi_reduction <add>, %50, %cst_33 [1] : vector<8x8xf32> to vector<8xf32>
      %64 = vector.shape_cast %63 : vector<8xf32> to vector<8x1xf32>
      %cst_34 = arith.constant dense<0.000000e+00> : vector<1xf32>
      %65 = vector.multi_reduction <add>, %64, %cst_34 [0] : vector<8x1xf32> to vector<1xf32>
      %66 = vector.shape_cast %65 : vector<1xf32> to vector<1x1xf32>
      %67 = arith.subf %62, %66 : vector<1x1xf32>
      %c0_35 = arith.constant 0 : index
      %c0_36 = arith.constant 0 : index
      %c0_37 = arith.constant 0 : index
      %68 = vector.load %arg5[%c0_35, %c0_36, %c0_37] : memref<1x1x1xf32, #tpu.memory_space<vmem>>, vector<1x1x1xf32>
      %69 = vector.shape_cast %68 : vector<1x1x1xf32> to vector<1x1xf32>
      %70 = vector.shape_cast %67 : vector<1x1xf32> to vector<1x1x1xf32>
      tpu.vector_store %arg5[%c0_35, %c0_36, %c0_37], %70 {strides = array<i32>} : memref<1x1x1xf32, #tpu.memory_space<vmem>>, vector<1x1x1xf32>,
    } else {
    }
    return
  }
  func.func @transform_0(%arg0: i32, %arg1: i32) -> (i32, i32) {
    %c0_i32 = arith.constant 0 : i32
    %c0_i32_0 = arith.constant 0 : i32
    return %arg0, %c0_i32 : i32, i32
  }
  func.func @transform_1(%arg0: i32, %arg1: i32) -> (i32, i32) {
    %c0_i32 = arith.constant 0 : i32
    %c0_i32_0 = arith.constant 0 : i32
    return %arg1, %c0_i32 : i32, i32
  }
  func.func @transform_2(%arg0: i32, %arg1: i32) -> (i32, i32, i32) {
    %c0_i32 = arith.constant 0 : i32
    %c0_i32_0 = arith.constant 0 : i32
    %c0_i32_1 = arith.constant 0 : i32
    return %arg0, %c0_i32, %c0_i32_0 : i32, i32, i32
  }
  func.func @transform_3(%arg0: i32, %arg1: i32) -> (i32, i32, i32) {
    %c0_i32 = arith.constant 0 : i32
    %c0_i32_0 = arith.constant 0 : i32
    %c0_i32_1 = arith.constant 0 : i32
    return %arg0, %c0_i32, %c0_i32_0 : i32, i32, i32
  }
}

</mosaic_0001>

<llo_original>
// kernel: tpu_custom_call.1
$region0: #{tpu_custom_call.1}
  #allocation0 [shape = 'u32[]', space=smem, size = 0x4, offset = 0x4, fixed_abs, tag = 'smem constant byte address 0x4 - core index']
  #allocation1 [shape = 'u32[144,128]{1,0:T(1,128)}', space=vmem, size = 0x12000, scoped, tag = 'internal scratch']
  %s0 = inlined_call_operand.hbm [shape: f32[8,32], index: 0, kind: input, shape index: {}]
  %s1 = inlined_call_operand.hbm [shape: f32[8,32], index: 1, kind: input, shape index: {}]
  %s2 = inlined_call_operand.hbm [shape: f32[1,1,1], index: 2, kind: output, shape index: {0}]
  %s3 = inlined_call_operand.hbm [shape: f32[1,1,1], index: 3, kind: output, shape index: {1}]
  %4 = xla_tuple %s2, %s3
  %s5 = sld [smem:[#allocation0]]
  $region42: #{tpu_custom_call.1} parent=0
    _
  %s7 = ssub.s32 1, %s5
  %s8 = scalar_select 0, %s7, %s5
  $region1: #{tpu_custom_call.1} parent=0
    #allocation2 [shape = 'u8[4096]{0}', space=vmem, size = 0x1000, scoped, tag = 'input window, operand 0, single buffered']
    #allocation3 [shape = 's32[1]{0}', space=sflag, size = 0x4, scoped, tag = 'scoped memory for tpu_custom_call.1']
    #allocation4 [shape = 's32[1]{0}', space=sflag, size = 0x4, scoped, tag = 'scoped memory for tpu_custom_call.1']
    #allocation5 [shape = 'u8[4096]{0}', space=vmem, size = 0x1000, scoped, tag = 'input window, operand 1, single buffered']
    #allocation6 [shape = 's32[1]{0}', space=sflag, size = 0x4, scoped, tag = 'scoped memory for tpu_custom_call.1']
    #allocation7 [shape = 'u8[512]{0}', space=vmem, size = 0x400, scoped, tag = 'output window, operand 0, single buffered']
    #allocation8 [shape = 'u8[512]{0}', space=vmem, size = 0x400, scoped, tag = 'output window, operand 1, single buffered']
    #allocation9 [shape = 's32[1]{0}', space=sflag, size = 0x4, scoped, tag = 'scoped memory for tpu_custom_call.1']
    %9 = vsyncpa [#allocation3], 0
    %10 = vsyncpa [#allocation6], 0
    %11 = vsyncpa [#allocation4], 0
    %12 = vsyncpa [#allocation9], 0
    // Predicated region
    $region2: #{tpu_custom_call.1} parent=1 // pred_check
      _
    $region3: #{tpu_custom_call.1} parent=1 // pred_check_branch
      %14 = sbr.rel (0) target = $region5
    $region4: #{tpu_custom_call.1} parent=1 // pred_region
      %s16 = ssub.s32 128, 128
      %17 = vsyncadd [#allocation3], %s16
      %s19 = sshll.u32 [#allocation2], 4
      %s20 = int_to_ptr.vmem [resolvable:$true] %s19
      %22 = dma.hbm_to_vmem [thread:$0]  %s0, 128, %s20, [#allocation3]
    $region5: #{tpu_custom_call.1} parent=1 // pred_fallthru
      _
    // Predicated region
    $region6: #{tpu_custom_call.1} parent=1 // pred_check
      _
    $region7: #{tpu_custom_call.1} parent=1 // pred_check_branch
      %24 = sbr.rel (0) target = $region9
    $region8: #{tpu_custom_call.1} parent=1 // pred_region
      %s26 = ssub.s32 128, 128
      %27 = vsyncadd [#allocation6], %s26
      %s29 = sshll.u32 [#allocation5], 4
      %s30 = int_to_ptr.vmem [resolvable:$true] %s29
      %32 = dma.hbm_to_vmem [thread:$0]  %s1, 128, %s30, [#allocation6]
    $region9: #{tpu_custom_call.1} parent=1 // pred_fallthru
      _
    // Predicated region
    $region10: #{tpu_custom_call.1} parent=1 // pred_check
      _
    $region11: #{tpu_custom_call.1} parent=1 // pred_check_branch
      %34 = sbr.rel (0) target = $region13
    $region12: #{tpu_custom_call.1} parent=1 // pred_region
      %35 = dma.done [#allocation3], 128
    $region13: #{tpu_custom_call.1} parent=1 // pred_fallthru
      _
    // Predicated region
    $region14: #{tpu_custom_call.1} parent=1 // pred_check
      _
    $region15: #{tpu_custom_call.1} parent=1 // pred_check_branch
      %37 = sbr.rel (0) target = $region17
    $region16: #{tpu_custom_call.1} parent=1 // pred_region
      %38 = dma.done [#allocation6], 128
    $region17: #{tpu_custom_call.1} parent=1 // pred_fallthru
      _
    %p39 = scmp.eq.s32.totalorder 0, 0
    // Predicated region
    $region18: #{tpu_custom_call.1} parent=1 // pred_check
      %p40 = pneg %p39
    $region19: #{tpu_custom_call.1} parent=1 // pred_check_branch
      %42 = sbr.rel (%p40) target = $region21
    $region20: #{tpu_custom_call.1} parent=1 // pred_region
      %vm43 = vcmask 0
      %44 = vst.msk [vmem:[#allocation7] sm:$0x1] %vm43, 0.0
      %45 = vst.msk [vmem:[#allocation8] sm:$0x1] %vm43, 0.0
    $region21: #{tpu_custom_call.1} parent=1 // pred_fallthru
      _
    %v46 = vld [vmem:[#allocation2] sm:$0xff]
    %v47 = vld [vmem:[#allocation5] sm:$0xff]
    %vm48 = vcmask 261120
    %v50 = vsel %vm48, %v46, 0
    %v53 = vsel %vm48, %v47, 0
    %55 = vmatprep.subr.mxu0 0.0
    %56 = vmatpush1.xpose.msra.mxu0 0.0
    %57 = vmatprep.subr.mxu0 0.0
    %58 = vmatpush1.xpose.msra.mxu0 0.0
    %59 = vmatprep.subr.mxu0 0.0
    %60 = vmatpush1.xpose.msra.mxu0 0.0
    %61 = vmatprep.subr.mxu0 0.0
    %62 = vmatpush1.xpose.msra.mxu0 0.0
    %63 = vmatprep.subr.mxu0 0.0
    %64 = vmatpush1.xpose.msra.mxu0 0.0
    %65 = vmatprep.subr.mxu0 0.0
    %66 = vmatpush1.xpose.msra.mxu0 0.0
    %67 = vmatprep.subr.mxu0 0.0
    %68 = vmatpush1.xpose.msra.mxu0 0.0
    %69 = vmatprep.subr.mxu0 0.0
    %70 = vmatpush1.xpose.msra.mxu0 0.0
    %71 = vmatprep.subr.mxu0 0.0
    %72 = vmatpush1.xpose.msra.mxu0 0.0
    %73 = vmatprep.subr.mxu0 0.0
    %74 = vmatpush1.xpose.msra.mxu0 0.0
    %75 = vmatprep.subr.mxu0 0.0
    %76 = vmatpush1.xpose.msra.mxu0 0.0
    %77 = vmatprep.subr.mxu0 0.0
    %78 = vmatpush1.xpose.msra.mxu0 0.0
    %79 = vmatprep.subr.mxu0 0.0
    %80 = vmatpush1.xpose.msra.mxu0 0.0
    %81 = vmatprep.subr.mxu0 0.0
    %82 = vmatpush1.xpose.msra.mxu0 0.0
    %83 = vmatprep.subr.mxu0 0.0
    %84 = vmatpush1.xpose.msra.mxu0 0.0
    %85 = vmatprep.subr.mxu0 0.0
    %86 = vmatpush1.xpose.msra.mxu0 %v53
    %87 = vmatprep.subr.mxu0 0.0
    %88 = vmatpush2.xpose.msra.mxu0 0.0
    %89 = vmatprep.subr.mxu0 0.0
    %90 = vmatpush2.xpose.msra.mxu0 0.0
    %91 = vmatprep.subr.mxu0 0.0
    %92 = vmatpush2.xpose.msra.mxu0 0.0
    %93 = vmatprep.subr.mxu0 0.0
    %94 = vmatpush2.xpose.msra.mxu0 0.0
    %95 = vmatprep.subr.mxu0 0.0
    %96 = vmatpush2.xpose.msra.mxu0 0.0
    %97 = vmatprep.subr.mxu0 0.0
    %98 = vmatpush2.xpose.msra.mxu0 0.0
    %99 = vmatprep.subr.mxu0 0.0
    %100 = vmatpush2.xpose.msra.mxu0 0.0
    %101 = vmatprep.subr.mxu0 0.0
    %102 = vmatpush2.xpose.msra.mxu0 0.0
    %103 = vmatprep.subr.mxu0 0.0
    %104 = vmatpush2.xpose.msra.mxu0 0.0
    %105 = vmatprep.subr.mxu0 0.0
    %106 = vmatpush2.xpose.msra.mxu0 0.0
    %107 = vmatprep.subr.mxu0 0.0
    %108 = vmatpush2.xpose.msra.mxu0 0.0
    %109 = vmatprep.subr.mxu0 0.0
    %110 = vmatpush2.xpose.msra.mxu0 0.0
    %111 = vmatprep.subr.mxu0 0.0
    %112 = vmatpush2.xpose.msra.mxu0 0.0
    %113 = vmatprep.subr.mxu0 0.0
    %114 = vmatpush2.xpose.msra.mxu0 0.0
    %115 = vmatprep.subr.mxu0 0.0
    %116 = vmatpush2.xpose.msra.mxu0 0.0
    %117 = vmatprep.subr.mxu0 0.0
    %118 = vmatpush2.xpose.msra.mxu0 0.0
    %119 = vmatprep.mubr.f32.mxu0 0.0
    %120 = vmatmul.mubr.f32.gmra.mxu0 %v50
    %v121 = vpop.f32.mrf.mxu0
    %v122 = vadd.f32 0.0, %v121
    %v123 = vpop.f32.mrf.mxu0
    %124 = vdwg.mxu0
    %v125 = vmax.f32 %v122, 0.0
    %v126 = vand.u32 2147483647, %v122
    %v127 = vsub.f32 0.0, %v126
    %v128 = vmul.f32 %v127, 1.442695
    %v129 = vpow.pop %v128
    %v130 = vadd.f32 %v129, 1.0
    %v131 = vlog2.pop %v130
    %v132 = vmul.f32 %v131, 0.6931472
    %v133 = vmul.f32 -0.5, %v129
    %v134 = vadd.f32 %v133, 1.0
    %v135 = vmul.f32 %v134, %v129
    %v136 = vand.u32 2147483647, %v129
    %vm137 = vcmp.lt.f32.partialorder %v136, 0.0004427343
    %v138 = vsel %vm137, %v135, %v132
    %v139 = vadd.f32 %v125, %v138
    %vm140 = vcmask 64512
    %v141 = vsel %vm140, %v139, 0.0
    %142 = vadd.xlane.f32.xlu0 %v141
    %v143 = vpop.xlane.xlu0 %142
    %v144 = vrot.slane %v143, 4
    %v145 = vadd.f32 %v143, %v144
    %v146 = vrot.slane %v145, 2
    %v147 = vadd.f32 %v145, %v146
    %v148 = vrot.slane %v147, 1
    %v149 = vadd.f32 %v147, %v148
    %v150 = vld [vmem:[#allocation8] sm:$0x1]
    %v151 = vsub.f32 %v149, 44.36142
    %v152 = vadd.f32 %v150, %v151
    %vm153 = vcmask 0
    %154 = vst.msk [vmem:[#allocation8] sm:$0x1] %vm153, %v152
    %s155 = smul.u32 0, 8
    %s156 = smul.u32 0, 8
    %s157 = sadd.s32 %s156, 8
    %p158 = scmp.lt.s32.totalorder %s155, %s157
    %s159 = sadd.s32 %s155, 8
    %p160 = scmp.lt.s32.totalorder %s156, %s159
    %p161 = pnand %p158, %p160
    %p162 = pneg %p161
    // Predicated region
    $region22: #{tpu_custom_call.1} parent=1 // pred_check
      _
    $region23: #{tpu_custom_call.1} parent=1 // pred_check_branch
      %164 = sbr.rel (%p161) target = $region25
    $region24: #{tpu_custom_call.1} parent=1 // pred_region
      %v165 = vlaneseq
      %v166 = vshrl.u32 %v165, 7
      %v167 = vstv %s155
      %v168 = vadd.s32 %v166, %v167
      %v169 = vlaneseq
      %v170 = vand.u32 %v169, 127
      %v171 = vstv %s156
      %v172 = vadd.s32 %v170, %v171
      %vm173 = vcmp.eq.s32.totalorder %v168, %v172
      %v174 = vsub.f32 0.6931472, %v139
      %v175 = vadd.f32 %v174, %v122
      %v176 = vsel %vm173, %v175, 0.0
      %v177 = vsub.f32 %v139, 0.6931472
      %v178 = vsel %vm173, %v177, 0.0
      %v179 = vld [vmem:[#allocation7] sm:$0x1]
      %v180 = vsel %vm140, %v176, 0.0
      %181 = vadd.xlane.f32.xlu0 %v180
      %v182 = vpop.xlane.xlu0 %181
      %v183 = vrot.slane %v182, 4
      %v184 = vadd.f32 %v182, %v183
      %v185 = vrot.slane %v184, 2
      %v186 = vadd.f32 %v184, %v185
      %v187 = vrot.slane %v186, 1
      %v188 = vadd.f32 %v186, %v187
      %v189 = vadd.f32 %v179, %v188
      %190 = vst.msk [vmem:[#allocation7] sm:$0x1] %vm153, %v189
      %v191 = vld [vmem:[#allocation8] sm:$0x1]
      %v192 = vsel %vm140, %v178, 0.0
      %193 = vadd.xlane.f32.xlu0 %v192
      %v194 = vpop.xlane.xlu0 %193
      %v195 = vrot.slane %v194, 4
      %v196 = vadd.f32 %v194, %v195
      %v197 = vrot.slane %v196, 2
      %v198 = vadd.f32 %v196, %v197
      %v199 = vrot.slane %v198, 1
      %v200 = vadd.f32 %v198, %v199
      %v201 = vsub.f32 %v191, %v200
      %202 = vst.msk [vmem:[#allocation8] sm:$0x1] %vm153, %v201
    $region25: #{tpu_custom_call.1} parent=1 // pred_fallthru
      _
    // Predicated region
    $region26: #{tpu_custom_call.1} parent=1 // pred_check
      _
    $region27: #{tpu_custom_call.1} parent=1 // pred_check_branch
      %204 = sbr.rel (0) target = $region29
    $region28: #{tpu_custom_call.1} parent=1 // pred_region
      %s206 = ssub.s32 16, 16
      %207 = vsyncadd [#allocation4], %s206
      %s209 = sshll.u32 [#allocation7], 4
      %s210 = int_to_ptr.vmem [resolvable:$true] %s209
      %212 = dma.vmem_to_hbm [thread:$0]  %s210, 16, %s2, [#allocation4]
    $region29: #{tpu_custom_call.1} parent=1 // pred_fallthru
      _
    // Predicated region
    $region30: #{tpu_custom_call.1} parent=1 // pred_check
      _
    $region31: #{tpu_custom_call.1} parent=1 // pred_check_branch
      %214 = sbr.rel (0) target = $region33
    $region32: #{tpu_custom_call.1} parent=1 // pred_region
      %s216 = ssub.s32 16, 16
      %217 = vsyncadd [#allocation9], %s216
      %s219 = sshll.u32 [#allocation8], 4
      %s220 = int_to_ptr.vmem [resolvable:$true] %s219
      %222 = dma.vmem_to_hbm [thread:$0]  %s220, 16, %s3, [#allocation9]
    $region33: #{tpu_custom_call.1} parent=1 // pred_fallthru
      _
    // Predicated region
    $region34: #{tpu_custom_call.1} parent=1 // pred_check
      _
    $region35: #{tpu_custom_call.1} parent=1 // pred_check_branch
      %224 = sbr.rel (0) target = $region37
    $region36: #{tpu_custom_call.1} parent=1 // pred_region
      %225 = dma.done [#allocation4], 16
    $region37: #{tpu_custom_call.1} parent=1 // pred_fallthru
      _
    // Predicated region
    $region38: #{tpu_custom_call.1} parent=1 // pred_check
      _
    $region39: #{tpu_custom_call.1} parent=1 // pred_check_branch
      %227 = sbr.rel (0) target = $region41
    $region40: #{tpu_custom_call.1} parent=1 // pred_region
      %228 = dma.done [#allocation9], 16
    $region41: #{tpu_custom_call.1} parent=1 // pred_fallthru
      _
    %229 = vsyncpa [#allocation3], 1
    %230 = vsyncpa [#allocation6], 1
    %231 = vsyncpa [#allocation4], 1
    %232 = vsyncpa [#allocation9], 1

</llo_original>
